<compile_context>
chip_gen: v6e
topology: v6e:2x2x1
jax: 0.10.0
libtpu: 0.0.40
codegen_flags: <defaults>
</compile_context>

<pallas_src>
import functools
import math

import jax
import jax.numpy as jnp
from jax.experimental import pallas as pl
from jax.experimental.pallas import tpu as pltpu

_HALF_LOG_2PI = 0.5 * math.log(2.0 * math.pi)


def _round_up(x, m):
    return ((x + m - 1) // m) * m


def _choose_batch_tile(B, D_in, H, D_out, *, target_step_bytes=2 << 20,
                       vmem_budget_bytes=40 << 20):
    """Pick TB (batch columns / lanes per grid step) and the grid size.

    - >= ~2 MB of x/noise/out HBM traffic per step (amortize the ~0.35 us
      per-grid-step pipeline overhead; kernel is memory-bound).
    - bounded so double-buffered IO tiles + h1/h2 intermediates fit VMEM.
    - >= 2 grid steps whenever B allows it, so ("parallel",) grid semantics
      can shard steps across v7x's 2 TensorCores.
    """
    if B <= 128:
        return B, 1                              # single full-batch block
    io_per_col = 4 * (D_in + 3 * D_out)                   # x + noise + packed out
    vmem_per_col = 4 * (2 * (D_in + 3 * D_out) + 2 * H)   # 2x-buffered IO + h1 + h2
    weight_bytes = 4 * (D_in * H + H * H + H * D_out + 2 * H + 2 * D_out)
    budget = max(vmem_budget_bytes - weight_bytes, 8 << 20)
    tb = min(target_step_bytes // io_per_col, budget // vmem_per_col)
    tb = max(128, (tb // 128) * 128)                       # multiple of 128 lanes
    tb = min(tb, _round_up(pl.cdiv(B, 2), 128))            # keep >= 2 grid steps
    return tb, pl.cdiv(B, tb)


def controller_kernel(x_ref, noise_ref,
                      w1_ref, b1_ref, w2_ref, b2_ref, w3_ref, b3_ref,
                      sigma_ref, out_ref, *, min_log_std):
    # Feature-major: features on sublanes, batch on lanes (128-lane dense).
    x = x_ref[...]                                        # (D_in, TB)
    wdt = w1_ref.dtype                                    # f32, or bf16 if requested

    # --- MLP: Linear -> ReLU -> Linear -> ReLU -> Linear -> Tanh (MXU + VPU/EUP) ---
    h1 = jnp.dot(w1_ref[...], x.astype(wdt),
                 preferred_element_type=jnp.float32) + b1_ref[...]
    h1 = jnp.maximum(h1, 0.0)                             # (H, TB)
    h2 = jnp.dot(w2_ref[...], h1.astype(wdt),
                 preferred_element_type=jnp.float32) + b2_ref[...]
    h2 = jnp.maximum(h2, 0.0)                             # (H, TB)
    means = jnp.tanh(
        jnp.dot(w3_ref[...], h2.astype(wdt),
                preferred_element_type=jnp.float32) + b3_ref[...])   # (D_out, TB)

    # --- scales = exp(clamp(sigma, min=min_log_std)) ---
    log_std = jnp.maximum(sigma_ref[...], min_log_std)    # (D_out, 1)
    scales = jnp.exp(log_std)

    # --- Normal(means, scales).sample() via reparameterization ---
    noise = noise_ref[...]                                # (D_out, TB)
    action = means + scales * noise

    # --- log_prob: action - means == scales * noise  =>  -0.5*noise^2 - log_std - c
    logp = -0.5 * noise * noise - log_std - _HALF_LOG_2PI

    # Single lane-dense packed store: [action ; logp] along sublanes.
    out_ref[...] = jnp.concatenate([action, logp], axis=0)   # (2*D_out, TB)


def controller_forward_t(x_t, params, noise_t, *, min_log_std, weight_dtype=None):
    """Feature-major forward pass.

    x_t: (D_in, B), noise_t: (D_out, B).
    Returns (action_t, log_prob_t), each (D_out, B) float32.
    """
    D_in, B = x_t.shape
    H = params["w1"].shape[0]
    D_out = params["w3"].shape[0]

    w1, w2, w3 = params["w1"], params["w2"], params["w3"]
    if weight_dtype is not None:
        # v6e/v7x: bf16 weights halve resident VMEM and double MXU rate at
        # large H; activations are cast per-dot in the kernel, accumulation
        # stays f32 via preferred_element_type.
        w1, w2, w3 = (w.astype(weight_dtype) for w in (w1, w2, w3))

    TB, nb = _choose_batch_tile(B, D_in, H, D_out)

    kernel = functools.partial(controller_kernel, min_log_std=min_log_std)

    def resident(shape):
        # Whole array as one block with a constant index_map: kept resident in
        # VMEM across all grid steps.  Buffered(1): never re-fetched, so a
        # second pipeline buffer would be pure VMEM waste (matters once the
        # HxH weight is large).
        return pl.BlockSpec(shape, lambda i: (0, 0), pipeline_mode=pl.Buffered(1))

    weight_bytes = (w1.size * w1.dtype.itemsize + w2.size * w2.dtype.itemsize
                    + w3.size * w3.dtype.itemsize + 4 * (2 * H + 2 * D_out))
    io_bytes = 4 * B * (D_in + 3 * D_out)                 # x + noise + packed out
    tile_vmem = 4 * TB * (2 * (D_in + 3 * D_out) + 2 * H)
    vmem_limit = int(min(64 << 20, max(32 << 20, 2 * (weight_bytes + tile_vmem))))

    cost = pl.CostEstimate(
        flops=2 * B * (D_in * H + H * H + H * D_out),
        transcendentals=B * D_out,                        # tanh (exp is O(D_out))
        bytes_accessed=io_bytes + weight_bytes)

    # No padding of x_t / noise_t: grid = cdiv(B, TB); a ragged tail block is
    # handled by Pallas boundary handling (OOB writes dropped, tail rows never
    # read back).
    packed = pl.pallas_call(
        kernel,
        out_shape=jax.ShapeDtypeStruct((2 * D_out, B), jnp.float32),
        grid=(nb,),
        in_specs=[
            pl.BlockSpec((D_in, TB), lambda i: (0, i)),    # x^T   (batch on lanes)
            pl.BlockSpec((D_out, TB), lambda i: (0, i)),   # noise^T
            resident((H, D_in)), resident((H, 1)),         # w1, b1
            resident((H, H)), resident((H, 1)),            # w2, b2
            resident((D_out, H)), resident((D_out, 1)),    # w3, b3
            resident((D_out, 1)),                          # sigma
        ],
        out_specs=pl.BlockSpec((2 * D_out, TB), lambda i: (0, i)),
        compiler_params=pltpu.CompilerParams(
            dimension_semantics=("parallel",),
            vmem_limit_bytes=vmem_limit),
        cost_estimate=cost,
    )(x_t, noise_t, w1, params["b1"], w2, params["b2"], w3, params["b3"],
      params["sigma"])

    return packed[:D_out], packed[D_out:]


def controller_forward(x, params, noise, *, min_log_std, weight_dtype=None):
    """(B, D_in) -> ((B, D_out) action, (B, D_out) log_prob).

    Thin compatibility wrapper around the feature-major kernel; the transposes
    here are layout plumbing only.  Producers/consumers that can work
    feature-major should call controller_forward_t directly and skip them.
    """
    action_t, logp_t = controller_forward_t(
        x.T, params, noise.T, min_log_std=min_log_std, weight_dtype=weight_dtype)
    return action_t.T, logp_t.T


def init_params(key, d_in, h, d_out, init_std=1.0):
    """Synthetic params in PyTorch nn.Linear native (out_features, in_features)
    layout; biases / sigma are (dim, 1) columns so they broadcast across the
    lane (batch) dimension inside the kernel."""
    k1, k2, k3, k4, k5, k6 = jax.random.split(key, 6)
    s = 0.1
    return {
        "w1": s * jax.random.normal(k1, (h, d_in), jnp.float32),
        "b1": s * jax.random.normal(k2, (h, 1), jnp.float32),
        "w2": s * jax.random.normal(k3, (h, h), jnp.float32),
        "b2": s * jax.random.normal(k4, (h, 1), jnp.float32),
        "w3": s * jax.random.normal(k5, (d_out, h), jnp.float32),
        "b3": s * jax.random.normal(k6, (d_out, 1), jnp.float32),
        "sigma": jnp.full((d_out, 1), math.log(init_std), jnp.float32),
    }


def reference_forward(x, params, noise, *, min_log_std):
    """Pure-JAX reference mirroring the PyTorch module semantics (standard
    batch-major layout, original (action-means)^2/(2*sigma^2) log_prob form)."""
    h1 = jnp.maximum(x @ params["w1"].T + params["b1"][:, 0], 0.0)
    h2 = jnp.maximum(h1 @ params["w2"].T + params["b2"][:, 0], 0.0)
    means = jnp.tanh(h2 @ params["w3"].T + params["b3"][:, 0])
    log_std = jnp.maximum(params["sigma"][:, 0], min_log_std)
    scales = jnp.exp(log_std)
    action = means + scales * noise
    logp = (-((action - means) ** 2) / (2.0 * scales ** 2)
            - log_std - 0.5 * math.log(2.0 * math.pi))
    return action, logp


if __name__ == "__main__":
    D_in, H, D_out = 16, 32, 8
    B = 256                      # 2 grid steps of 128 lanes each (exercises tiling)
    min_std = 1e-6
    min_log_std = math.log(min_std)

    key = jax.random.PRNGKey(0)
    kp, kx, kn = jax.random.split(key, 3)

    params = init_params(kp, D_in, H, D_out, init_std=1.0)
    x = jax.random.normal(kx, (B, D_in), jnp.float32)
    # Standard-normal noise for the reparameterized Normal sample (the
    # stochastic path of the PyTorch module, made deterministic here via a
    # fixed PRNG key so kernel and reference match exactly).
    noise = jax.random.normal(kn, (B, D_out), jnp.float32)

    action, log_prob = controller_forward(x, params, noise,
                                          min_log_std=min_log_std)
    jax.block_until_ready((action, log_prob))

    ref_action, ref_logp = reference_forward(x, params, noise,
                                             min_log_std=min_log_std)
    assert jnp.allclose(action, ref_action, atol=2e-5, rtol=2e-5)
    assert jnp.allclose(log_prob, ref_logp, atol=2e-5, rtol=2e-5)

    print("KERNEL_OK")
</pallas_src>

<mosaic_0001>
module attributes {stable_mosaic.version = 11 : i64} {
  func.func @controller_kernel(%arg0: i32, %arg1: memref<16x128xf32, #tpu.memory_space<vmem>>, %arg2: memref<8x128xf32, #tpu.memory_space<vmem>>, %arg3: memref<32x16xf32, #tpu.memory_space<vmem>>, %arg4: memref<32x1xf32, #tpu.memory_space<vmem>>, %arg5: memref<32x32xf32, #tpu.memory_space<vmem>>, %arg6: memref<32x1xf32, #tpu.memory_space<vmem>>, %arg7: memref<8x32xf32, #tpu.memory_space<vmem>>, %arg8: memref<8x1xf32, #tpu.memory_space<vmem>>, %arg9: memref<8x1xf32, #tpu.memory_space<vmem>>, %arg10: memref<16x128xf32, #tpu.memory_space<vmem>>) attributes {dimension_semantics = [#tpu.dimension_semantics<parallel>], iteration_bounds = array<i64: 2>, scalar_prefetch = 0 : i64, scratch_operands = 0 : i64, tpu.core_type = #tpu.core_type<tc>, window_params = [{transform_indices = @transform_0, window_bounds = array<i64: 16, 128>}, {transform_indices = @transform_1, window_bounds = array<i64: 8, 128>}, {pipeline_mode = #tpu.pipeline_mode<synchronous>, transform_indices = @transform_2, window_bounds = array<i64: 32, 16>}, {pipeline_mode = #tpu.pipeline_mode<synchronous>, transform_indices = @transform_3, window_bounds = array<i64: 32, 1>}, {pipeline_mode = #tpu.pipeline_mode<synchronous>, transform_indices = @transform_4, window_bounds = array<i64: 32, 32>}, {pipeline_mode = #tpu.pipeline_mode<synchronous>, transform_indices = @transform_5, window_bounds = array<i64: 32, 1>}, {pipeline_mode = #tpu.pipeline_mode<synchronous>, transform_indices = @transform_6, window_bounds = array<i64: 8, 32>}, {pipeline_mode = #tpu.pipeline_mode<synchronous>, transform_indices = @transform_7, window_bounds = array<i64: 8, 1>}, {pipeline_mode = #tpu.pipeline_mode<synchronous>, transform_indices = @transform_8, window_bounds = array<i64: 8, 1>}, {transform_indices = @transform_9, window_bounds = array<i64: 16, 128>}]} {
    %c0 = arith.constant 0 : index
    %c0_0 = arith.constant 0 : index
    %0 = vector.load %arg1[%c0, %c0_0] : memref<16x128xf32, #tpu.memory_space<vmem>>, vector<16x128xf32>
    %c0_1 = arith.constant 0 : index
    %c0_2 = arith.constant 0 : index
    %1 = vector.load %arg3[%c0_1, %c0_2] : memref<32x16xf32, #tpu.memory_space<vmem>>, vector<32x16xf32>
    %cst = arith.constant dense<0.000000e+00> : vector<32x128xf32>
    %2 = tpu.matmul %1, %0, %cst {dimension_numbers = #tpu.dot_dimension_numbers<[1], [0], [0], [1], [0, 0, 1, 1], [], []>} : vector<32x16xf32>, vector<16x128xf32>, vector<32x128xf32> -> vector<32x128xf32>
    %c0_3 = arith.constant 0 : index
    %c0_4 = arith.constant 0 : index
    %3 = vector.load %arg4[%c0_3, %c0_4] : memref<32x1xf32, #tpu.memory_space<vmem>>, vector<32x1xf32>
    %4 = vector.broadcast %3 : vector<32x1xf32> to vector<32x128xf32>
    %5 = arith.addf %2, %4 : vector<32x128xf32>
    %cst_5 = arith.constant 0.000000e+00 : f32
    %6 = vector.broadcast %cst_5 : f32 to vector<32x128xf32>
    %7 = arith.maximumf %5, %6 : vector<32x128xf32>
    %c0_6 = arith.constant 0 : index
    %c0_7 = arith.constant 0 : index
    %8 = vector.load %arg5[%c0_6, %c0_7] : memref<32x32xf32, #tpu.memory_space<vmem>>, vector<32x32xf32>
    %cst_8 = arith.constant dense<0.000000e+00> : vector<32x128xf32>
    %9 = tpu.matmul %8, %7, %cst_8 {dimension_numbers = #tpu.dot_dimension_numbers<[1], [0], [0], [1], [0, 0, 1, 1], [], []>} : vector<32x32xf32>, vector<32x128xf32>, vector<32x128xf32> -> vector<32x128xf32>
    %c0_9 = arith.constant 0 : index
    %c0_10 = arith.constant 0 : index
    %10 = vector.load %arg6[%c0_9, %c0_10] : memref<32x1xf32, #tpu.memory_space<vmem>>, vector<32x1xf32>
    %11 = vector.broadcast %10 : vector<32x1xf32> to vector<32x128xf32>
    %12 = arith.addf %9, %11 : vector<32x128xf32>
    %cst_11 = arith.constant 0.000000e+00 : f32
    %13 = vector.broadcast %cst_11 : f32 to vector<32x128xf32>
    %14 = arith.maximumf %12, %13 : vector<32x128xf32>
    %c0_12 = arith.constant 0 : index
    %c0_13 = arith.constant 0 : index
    %15 = vector.load %arg7[%c0_12, %c0_13] : memref<8x32xf32, #tpu.memory_space<vmem>>, vector<8x32xf32>
    %cst_14 = arith.constant dense<0.000000e+00> : vector<8x128xf32>
    %16 = tpu.matmul %15, %14, %cst_14 {dimension_numbers = #tpu.dot_dimension_numbers<[1], [0], [0], [1], [0, 0, 1, 1], [], []>} : vector<8x32xf32>, vector<32x128xf32>, vector<8x128xf32> -> vector<8x128xf32>
    %c0_15 = arith.constant 0 : index
    %c0_16 = arith.constant 0 : index
    %17 = vector.load %arg8[%c0_15, %c0_16] : memref<8x1xf32, #tpu.memory_space<vmem>>, vector<8x1xf32>
    %18 = vector.broadcast %17 : vector<8x1xf32> to vector<8x128xf32>
    %19 = arith.addf %16, %18 : vector<8x128xf32>
    %20 = math.tanh %19 : vector<8x128xf32>
    %c0_17 = arith.constant 0 : index
    %c0_18 = arith.constant 0 : index
    %21 = vector.load %arg9[%c0_17, %c0_18] : memref<8x1xf32, #tpu.memory_space<vmem>>, vector<8x1xf32>
    %cst_19 = arith.constant -13.8155107 : f32
    %22 = vector.broadcast %cst_19 : f32 to vector<8x1xf32>
    %23 = arith.maximumf %21, %22 : vector<8x1xf32>
    %24 = math.exp %23 : vector<8x1xf32>
    %c0_20 = arith.constant 0 : index
    %c0_21 = arith.constant 0 : index
    %25 = vector.load %arg2[%c0_20, %c0_21] : memref<8x128xf32, #tpu.memory_space<vmem>>, vector<8x128xf32>
    %26 = vector.broadcast %24 : vector<8x1xf32> to vector<8x128xf32>
    %27 = arith.mulf %26, %25 : vector<8x128xf32>
    %28 = arith.addf %20, %27 : vector<8x128xf32>
    %cst_22 = arith.constant -5.000000e-01 : f32
    %29 = vector.broadcast %cst_22 : f32 to vector<8x128xf32>
    %30 = arith.mulf %29, %25 : vector<8x128xf32>
    %31 = arith.mulf %30, %25 : vector<8x128xf32>
    %32 = vector.broadcast %23 : vector<8x1xf32> to vector<8x128xf32>
    %33 = arith.subf %31, %32 : vector<8x128xf32>
    %cst_23 = arith.constant 0.918938517 : f32
    %34 = vector.broadcast %cst_23 : f32 to vector<8x128xf32>
    %35 = arith.subf %33, %34 : vector<8x128xf32>
    %36 = tpu.concatenate %28, %35 in 0 : vector<8x128xf32>, vector<8x128xf32> -> vector<16x128xf32>
    %c0_24 = arith.constant 0 : index
    %c0_25 = arith.constant 0 : index
    %37 = vector.load %arg10[%c0_24, %c0_25] : memref<16x128xf32, #tpu.memory_space<vmem>>, vector<16x128xf32>
    tpu.vector_store %arg10[%c0_24, %c0_25], %36 {strides = array<i32>} : memref<16x128xf32, #tpu.memory_space<vmem>>, vector<16x128xf32>,
    return
  }
  func.func @transform_0(%arg0: i32) -> (i32, i32) {
    %c0_i32 = arith.constant 0 : i32
    %c0_i32_0 = arith.constant 0 : i32
    return %c0_i32, %arg0 : i32, i32
  }
  func.func @transform_1(%arg0: i32) -> (i32, i32) {
    %c0_i32 = arith.constant 0 : i32
    %c0_i32_0 = arith.constant 0 : i32
    return %c0_i32, %arg0 : i32, i32
  }
  func.func @transform_2(%arg0: i32) -> (i32, i32) {
    %c0_i32 = arith.constant 0 : i32
    %c0_i32_0 = arith.constant 0 : i32
    %c0_i32_1 = arith.constant 0 : i32
    return %c0_i32, %c0_i32_0 : i32, i32
  }
  func.func @transform_3(%arg0: i32) -> (i32, i32) {
    %c0_i32 = arith.constant 0 : i32
    %c0_i32_0 = arith.constant 0 : i32
    %c0_i32_1 = arith.constant 0 : i32
    return %c0_i32, %c0_i32_0 : i32, i32
  }
  func.func @transform_4(%arg0: i32) -> (i32, i32) {
    %c0_i32 = arith.constant 0 : i32
    %c0_i32_0 = arith.constant 0 : i32
    %c0_i32_1 = arith.constant 0 : i32
    return %c0_i32, %c0_i32_0 : i32, i32
  }
  func.func @transform_5(%arg0: i32) -> (i32, i32) {
    %c0_i32 = arith.constant 0 : i32
    %c0_i32_0 = arith.constant 0 : i32
    %c0_i32_1 = arith.constant 0 : i32
    return %c0_i32, %c0_i32_0 : i32, i32
  }
  func.func @transform_6(%arg0: i32) -> (i32, i32) {
    %c0_i32 = arith.constant 0 : i32
    %c0_i32_0 = arith.constant 0 : i32
    %c0_i32_1 = arith.constant 0 : i32
    return %c0_i32, %c0_i32_0 : i32, i32
  }
  func.func @transform_7(%arg0: i32) -> (i32, i32) {
    %c0_i32 = arith.constant 0 : i32
    %c0_i32_0 = arith.constant 0 : i32
    %c0_i32_1 = arith.constant 0 : i32
    return %c0_i32, %c0_i32_0 : i32, i32
  }
  func.func @transform_8(%arg0: i32) -> (i32, i32) {
    %c0_i32 = arith.constant 0 : i32
    %c0_i32_0 = arith.constant 0 : i32
    %c0_i32_1 = arith.constant 0 : i32
    return %c0_i32, %c0_i32_0 : i32, i32
  }
  func.func @transform_9(%arg0: i32) -> (i32, i32) {
    %c0_i32 = arith.constant 0 : i32
    %c0_i32_0 = arith.constant 0 : i32
    return %c0_i32, %arg0 : i32, i32
  }
}

</mosaic_0001>

<llo_original>
// kernel: tpu_custom_call.1
$region0: #{tpu_custom_call.1}
  #allocation0 [shape = 'u32[]', space=smem, size = 0x4, offset = 0x4, fixed_abs, tag = 'smem constant byte address 0x4 - core index']
  #allocation1 [shape = 'u32[144,128]{1,0:T(1,128)}', space=vmem, size = 0x12000, scoped, tag = 'internal scratch']
  %s0 = inlined_call_operand.vmem [shape: f32[16,256], index: 0, kind: input, shape index: {}]
  %s1 = inlined_call_operand.vmem [shape: f32[8,256], index: 1, kind: input, shape index: {}]
  %s2 = inlined_call_operand.vmem [shape: f32[32,16], index: 2, kind: input, shape index: {}]
  %s3 = inlined_call_operand.vmem [shape: f32[32,1], index: 3, kind: input, shape index: {}]
  %s4 = inlined_call_operand.vmem [shape: f32[32,32], index: 4, kind: input, shape index: {}]
  %s5 = inlined_call_operand.vmem [shape: f32[32,1], index: 5, kind: input, shape index: {}]
  %s6 = inlined_call_operand.vmem [shape: f32[8,32], index: 6, kind: input, shape index: {}]
  %s7 = inlined_call_operand.vmem [shape: f32[8,1], index: 7, kind: input, shape index: {}]
  %s8 = inlined_call_operand.vmem [shape: f32[8,1], index: 8, kind: input, shape index: {}]
  %s9 = inlined_call_operand.hbm [shape: f32[16,256], index: 9, kind: output, shape index: {}]
  %s10 = sld [smem:[#allocation0]]
  $region107: #{tpu_custom_call.1} parent=0
    _
  %s12 = ssub.s32 1, %s10
  %s13 = scalar_select 0, %s12, %s10
  $region1: #{tpu_custom_call.1} parent=0
    #allocation2 [shape = 'u8[16384]{0}', space=vmem, size = 0x4000, scoped, tag = 'input window, operand 0']
    #allocation3 [shape = 'u8[16384]{0}', space=vmem, size = 0x4000, scoped, tag = 'output window, operand 0']
    #allocation4 [shape = 's32[2]{0}', space=sflag, size = 0x8, scoped, tag = 'scoped memory for tpu_custom_call.1']
    %14 = vsyncpa [#allocation4], 0
    %s15 = scalar_lea.sflag [#allocation4], 1
    %16 = vsyncpa %s15, 0
    loop: start=0, step=1, limit=4
    $region2: #{tpu_custom_call.1} parent=1 // loop_pre_header
      _
    $region3: #{tpu_custom_call.1} parent=1 // loop_header
      %s18 = sphi 0, %s22
      %p19 = scmp.ge.s32.totalorder %s18, 4
      %s28 = sphi 0, %s30
      %s31 = sphi 0, %s28
      %s32 = sphi 0, %s31
      %s48 = sphi 0, %s32
      %s54 = sphi 0, %s56
      %s57 = sphi 0, %s54
      %s58 = sphi 0, %s57
      %s74 = sphi 0, %s58
      %s78 = sphi 0, %s78
      %s80 = sphi 0, %s78
      %s81 = sphi 0, %s80
      %s95 = sphi 0, %s81
      %s99 = sphi 0, %s99
      %s101 = sphi 0, %s99
      %s102 = sphi 0, %s101
      %s116 = sphi 0, %s102
      %s120 = sphi 0, %s120
      %s122 = sphi 0, %s120
      %s123 = sphi 0, %s122
      %s137 = sphi 0, %s123
      %s141 = sphi 0, %s141
      %s143 = sphi 0, %s141
      %s144 = sphi 0, %s143
      %s158 = sphi 0, %s144
      %s162 = sphi 0, %s162
      %s164 = sphi 0, %s162
      %s165 = sphi 0, %s164
      %s179 = sphi 0, %s165
      %s183 = sphi 0, %s183
      %s185 = sphi 0, %s183
      %s186 = sphi 0, %s185
      %s200 = sphi 0, %s186
      %s204 = sphi 0, %s204
      %s206 = sphi 0, %s204
      %s207 = sphi 0, %s206
      %s221 = sphi 0, %s207
      %s227 = sphi 0, %s229
      %s230 = sphi 0, %s227
      %s231 = sphi 0, %s230
      %s247 = sphi 0, %s231
    $region4: #{tpu_custom_call.1} parent=1 // loop_header_branch
      %21 = sbr.rel (%p19) target = $region8
    $region5: #{tpu_custom_call.1} parent=1 // loop_body
      %s23 = ssub.s32 %s18, 1
      %s24 = ssub.s32 %s18, 2
      %s25 = sadd.s32 %s18, 1
      %s26 = ssub.s32 %s18, %s25
      %p27 = scmp.eq.s32.totalorder %s26, 0
      %s29 = sadd.s32 %s28, 1
      %s30 = scalar_select %p27, %s28, %s29
      %p33 = pneg %p27
      %p34 = scmp.eq.s32.totalorder %s18, 1
      %p35 = por %p33, %p34
      %p36 = scmp.ne.s32.totalorder %s28, %s31
      %p37 = scmp.eq.s32.totalorder %s18, 0
      %p38 = por %p36, %p37
      %p39 = scmp.ne.s32.totalorder %s28, %s31
      %p40 = scmp.eq.s32.totalorder %s23, 1
      %p41 = por %p39, %p40
      %p42 = scmp.ne.s32.totalorder %s31, %s32
      %p43 = scmp.eq.s32.totalorder %s23, 0
      %p44 = por %p42, %p43
      %p45 = scmp.ne.s32.totalorder %s31, %s32
      %p46 = scmp.eq.s32.totalorder %s24, 1
      %p47 = por %p45, %p46
      %p49 = scmp.ne.s32.totalorder %s32, %s48
      %p50 = scmp.eq.s32.totalorder %s24, 0
      %p51 = por %p49, %p50
      %s52 = ssub.s32 %s18, %s25
      %p53 = scmp.eq.s32.totalorder %s52, 0
      %s55 = sadd.s32 %s54, 1
      %s56 = scalar_select %p53, %s54, %s55
      %p59 = pneg %p53
      %p60 = scmp.eq.s32.totalorder %s18, 1
      %p61 = por %p59, %p60
      %p62 = scmp.ne.s32.totalorder %s54, %s57
      %p63 = scmp.eq.s32.totalorder %s18, 0
      %p64 = por %p62, %p63
      %p65 = scmp.ne.s32.totalorder %s54, %s57
      %p66 = scmp.eq.s32.totalorder %s23, 1
      %p67 = por %p65, %p66
      %p68 = scmp.ne.s32.totalorder %s57, %s58
      %p69 = scmp.eq.s32.totalorder %s23, 0
      %p70 = por %p68, %p69
      %p71 = scmp.ne.s32.totalorder %s57, %s58
      %p72 = scmp.eq.s32.totalorder %s24, 1
      %p73 = por %p71, %p72
      %p75 = scmp.ne.s32.totalorder %s58, %s74
      %p76 = scmp.eq.s32.totalorder %s24, 0
      %p77 = por %p75, %p76
      %s79 = sadd.s32 %s78, 1
      %p82 = scmp.eq.s32.totalorder %s18, 1
      %p83 = scmp.ne.s32.totalorder %s78, %s80
      %p84 = scmp.eq.s32.totalorder %s18, 0
      %p85 = por %p83, %p84
      %p86 = scmp.ne.s32.totalorder %s78, %s80
      %p87 = scmp.eq.s32.totalorder %s23, 1
      %p88 = por %p86, %p87
      %p89 = scmp.ne.s32.totalorder %s80, %s81
      %p90 = scmp.eq.s32.totalorder %s23, 0
      %p91 = por %p89, %p90
      %p92 = scmp.ne.s32.totalorder %s80, %s81
      %p93 = scmp.eq.s32.totalorder %s24, 1
      %p94 = por %p92, %p93
      %p96 = scmp.ne.s32.totalorder %s81, %s95
      %p97 = scmp.eq.s32.totalorder %s24, 0
      %p98 = por %p96, %p97
      %s100 = sadd.s32 %s99, 1
      %p103 = scmp.eq.s32.totalorder %s18, 1
      %p104 = scmp.ne.s32.totalorder %s99, %s101
      %p105 = scmp.eq.s32.totalorder %s18, 0
      %p106 = por %p104, %p105
      %p107 = scmp.ne.s32.totalorder %s99, %s101
      %p108 = scmp.eq.s32.totalorder %s23, 1
      %p109 = por %p107, %p108
      %p110 = scmp.ne.s32.totalorder %s101, %s102
      %p111 = scmp.eq.s32.totalorder %s23, 0
      %p112 = por %p110, %p111
      %p113 = scmp.ne.s32.totalorder %s101, %s102
      %p114 = scmp.eq.s32.totalorder %s24, 1
      %p115 = por %p113, %p114
      %p117 = scmp.ne.s32.totalorder %s102, %s116
      %p118 = scmp.eq.s32.totalorder %s24, 0
      %p119 = por %p117, %p118
      %s121 = sadd.s32 %s120, 1
      %p124 = scmp.eq.s32.totalorder %s18, 1
      %p125 = scmp.ne.s32.totalorder %s120, %s122
      %p126 = scmp.eq.s32.totalorder %s18, 0
      %p127 = por %p125, %p126
      %p128 = scmp.ne.s32.totalorder %s120, %s122
      %p129 = scmp.eq.s32.totalorder %s23, 1
      %p130 = por %p128, %p129
      %p131 = scmp.ne.s32.totalorder %s122, %s123
      %p132 = scmp.eq.s32.totalorder %s23, 0
      %p133 = por %p131, %p132
      %p134 = scmp.ne.s32.totalorder %s122, %s123
      %p135 = scmp.eq.s32.totalorder %s24, 1
      %p136 = por %p134, %p135
      %p138 = scmp.ne.s32.totalorder %s123, %s137
      %p139 = scmp.eq.s32.totalorder %s24, 0
      %p140 = por %p138, %p139
      %s142 = sadd.s32 %s141, 1
      %p145 = scmp.eq.s32.totalorder %s18, 1
      %p146 = scmp.ne.s32.totalorder %s141, %s143
      %p147 = scmp.eq.s32.totalorder %s18, 0
      %p148 = por %p146, %p147
      %p149 = scmp.ne.s32.totalorder %s141, %s143
      %p150 = scmp.eq.s32.totalorder %s23, 1
      %p151 = por %p149, %p150
      %p152 = scmp.ne.s32.totalorder %s143, %s144
      %p153 = scmp.eq.s32.totalorder %s23, 0
      %p154 = por %p152, %p153
      %p155 = scmp.ne.s32.totalorder %s143, %s144
      %p156 = scmp.eq.s32.totalorder %s24, 1
      %p157 = por %p155, %p156
      %p159 = scmp.ne.s32.totalorder %s144, %s158
      %p160 = scmp.eq.s32.totalorder %s24, 0
      %p161 = por %p159, %p160
      %s163 = sadd.s32 %s162, 1
      %p166 = scmp.eq.s32.totalorder %s18, 1
      %p167 = scmp.ne.s32.totalorder %s162, %s164
      %p168 = scmp.eq.s32.totalorder %s18, 0
      %p169 = por %p167, %p168
      %p170 = scmp.ne.s32.totalorder %s162, %s164
      %p171 = scmp.eq.s32.totalorder %s23, 1
      %p172 = por %p170, %p171
      %p173 = scmp.ne.s32.totalorder %s164, %s165
      %p174 = scmp.eq.s32.totalorder %s23, 0
      %p175 = por %p173, %p174
      %p176 = scmp.ne.s32.totalorder %s164, %s165
      %p177 = scmp.eq.s32.totalorder %s24, 1
      %p178 = por %p176, %p177
      %p180 = scmp.ne.s32.totalorder %s165, %s179
      %p181 = scmp.eq.s32.totalorder %s24, 0
      %p182 = por %p180, %p181
      %s184 = sadd.s32 %s183, 1
      %p187 = scmp.eq.s32.totalorder %s18, 1
      %p188 = scmp.ne.s32.totalorder %s183, %s185
      %p189 = scmp.eq.s32.totalorder %s18, 0
      %p190 = por %p188, %p189
      %p191 = scmp.ne.s32.totalorder %s183, %s185
      %p192 = scmp.eq.s32.totalorder %s23, 1
      %p193 = por %p191, %p192
      %p194 = scmp.ne.s32.totalorder %s185, %s186
      %p195 = scmp.eq.s32.totalorder %s23, 0
      %p196 = por %p194, %p195
      %p197 = scmp.ne.s32.totalorder %s185, %s186
      %p198 = scmp.eq.s32.totalorder %s24, 1
      %p199 = por %p197, %p198
      %p201 = scmp.ne.s32.totalorder %s186, %s200
      %p202 = scmp.eq.s32.totalorder %s24, 0
      %p203 = por %p201, %p202
      %s205 = sadd.s32 %s204, 1
      %p208 = scmp.eq.s32.totalorder %s18, 1
      %p209 = scmp.ne.s32.totalorder %s204, %s206
      %p210 = scmp.eq.s32.totalorder %s18, 0
      %p211 = por %p209, %p210
      %p212 = scmp.ne.s32.totalorder %s204, %s206
      %p213 = scmp.eq.s32.totalorder %s23, 1
      %p214 = por %p212, %p213
      %p215 = scmp.ne.s32.totalorder %s206, %s207
      %p216 = scmp.eq.s32.totalorder %s23, 0
      %p217 = por %p215, %p216
      %p218 = scmp.ne.s32.totalorder %s206, %s207
      %p219 = scmp.eq.s32.totalorder %s24, 1
      %p220 = por %p218, %p219
      %p222 = scmp.ne.s32.totalorder %s207, %s221
      %p223 = scmp.eq.s32.totalorder %s24, 0
      %p224 = por %p222, %p223
      %s225 = ssub.s32 %s18, %s25
      %p226 = scmp.eq.s32.totalorder %s225, 0
      %s228 = sadd.s32 %s227, 1
      %s229 = scalar_select %p226, %s227, %s228
      %p232 = pneg %p226
      %p233 = scmp.eq.s32.totalorder %s18, 1
      %p234 = por %p232, %p233
      %p235 = scmp.ne.s32.totalorder %s227, %s230
      %p236 = scmp.eq.s32.totalorder %s18, 0
      %p237 = por %p235, %p236
      %p238 = scmp.ne.s32.totalorder %s227, %s230
      %p239 = scmp.eq.s32.totalorder %s23, 1
      %p240 = por %p238, %p239
      %p241 = scmp.ne.s32.totalorder %s230, %s231
      %p242 = scmp.eq.s32.totalorder %s23, 0
      %p243 = por %p241, %p242
      %p244 = scmp.ne.s32.totalorder %s230, %s231
      %p245 = scmp.eq.s32.totalorder %s24, 1
      %p246 = por %p244, %p245
      %p248 = scmp.ne.s32.totalorder %s231, %s247
      %p249 = scmp.eq.s32.totalorder %s24, 0
      %p250 = por %p248, %p249
      %p251 = scmp.le.s32.totalorder 1, %s18
      %p252 = scmp.lt.s32.totalorder %s18, 3
      %p253 = pnand %p251, %p252
      %p254 = pneg %p253
      // Predicated region
      $region9: #{tpu_custom_call.1} parent=5 // pred_check
        _
      $region10: #{tpu_custom_call.1} parent=5 // pred_check_branch
        %256 = sbr.rel (%p253) target = $region12
      $region11: #{tpu_custom_call.1} parent=5 // pred_region
        %s257 = ssub.s32 %s18, 1
        // Predicated region
        $region13: #{tpu_custom_call.1} parent=11 // pred_check
          %p258 = pneg %p91
        $region14: #{tpu_custom_call.1} parent=11 // pred_check_branch
          %260 = sbr.rel (%p258) target = $region16
        $region15: #{tpu_custom_call.1} parent=11 // pred_region
          _
        $region16: #{tpu_custom_call.1} parent=11 // pred_fallthru
          _
        // Predicated region
        $region17: #{tpu_custom_call.1} parent=11 // pred_check
          %p261 = pneg %p112
        $region18: #{tpu_custom_call.1} parent=11 // pred_check_branch
          %263 = sbr.rel (%p261) target = $region20
        $region19: #{tpu_custom_call.1} parent=11 // pred_region
          _
        $region20: #{tpu_custom_call.1} parent=11 // pred_fallthru
          _
        // Predicated region
        $region21: #{tpu_custom_call.1} parent=11 // pred_check
          %p264 = pneg %p133
        $region22: #{tpu_custom_call.1} parent=11 // pred_check_branch
          %266 = sbr.rel (%p264) target = $region24
        $region23: #{tpu_custom_call.1} parent=11 // pred_region
          _
        $region24: #{tpu_custom_call.1} parent=11 // pred_fallthru
          _
        // Predicated region
        $region25: #{tpu_custom_call.1} parent=11 // pred_check
          %p267 = pneg %p154
        $region26: #{tpu_custom_call.1} parent=11 // pred_check_branch
          %269 = sbr.rel (%p267) target = $region28
        $region27: #{tpu_custom_call.1} parent=11 // pred_region
          _
        $region28: #{tpu_custom_call.1} parent=11 // pred_fallthru
          _
        // Predicated region
        $region29: #{tpu_custom_call.1} parent=11 // pred_check
          %p270 = pneg %p175
        $region30: #{tpu_custom_call.1} parent=11 // pred_check_branch
          %272 = sbr.rel (%p270) target = $region32
        $region31: #{tpu_custom_call.1} parent=11 // pred_region
          _
        $region32: #{tpu_custom_call.1} parent=11 // pred_fallthru
          _
        // Predicated region
        $region33: #{tpu_custom_call.1} parent=11 // pred_check
          %p273 = pneg %p196
        $region34: #{tpu_custom_call.1} parent=11 // pred_check_branch
          %275 = sbr.rel (%p273) target = $region36
        $region35: #{tpu_custom_call.1} parent=11 // pred_region
          _
        $region36: #{tpu_custom_call.1} parent=11 // pred_fallthru
          _
        // Predicated region
        $region37: #{tpu_custom_call.1} parent=11 // pred_check
          %p276 = pneg %p217
        $region38: #{tpu_custom_call.1} parent=11 // pred_check_branch
          %278 = sbr.rel (%p276) target = $region40
        $region39: #{tpu_custom_call.1} parent=11 // pred_region
          _
        $region40: #{tpu_custom_call.1} parent=11 // pred_fallthru
          _
      $region12: #{tpu_custom_call.1} parent=5 // pred_fallthru
        _
      %p279 = scmp.lt.s32.totalorder %s18, 2
      // Predicated region
      $region41: #{tpu_custom_call.1} parent=5 // pred_check
        %p280 = pneg %p279
      $region42: #{tpu_custom_call.1} parent=5 // pred_check_branch
        %282 = sbr.rel (%p280) target = $region44
      $region43: #{tpu_custom_call.1} parent=5 // pred_region
        // Predicated region
        $region45: #{tpu_custom_call.1} parent=43 // pred_check
          %p283 = pneg %p38
        $region46: #{tpu_custom_call.1} parent=43 // pred_check_branch
          %285 = sbr.rel (%p283) target = $region48
        $region47: #{tpu_custom_call.1} parent=43 // pred_region
          %s286 = sand.u32 %s28, 1
          %s287 = sand.u32 %s28, 1
          %s288 = smul.addr %s287, 16
          %s289 = scalar_lea.vmem [#allocation2], %s288
          %s290 = smul.addr %s18, 8
          %s291 = scalar_lea.vmem %s0, %s290
          // Predicated region
          $region49: #{tpu_custom_call.1} parent=47 // pred_check
            _
          $region50: #{tpu_custom_call.1} parent=47 // pred_check_branch
            %293 = sbr.rel (0) target = $region52
          $region51: #{tpu_custom_call.1} parent=47 // pred_region
            // Predicated region
            $region53: #{tpu_custom_call.1} parent=51 // pred_check
              _
            $region54: #{tpu_custom_call.1} parent=51 // pred_check_branch
              %295 = sbr.rel (0) target = $region56
            $region55: #{tpu_custom_call.1} parent=51 // pred_region
              // Predicated region
              $region68: #{tpu_custom_call.1} parent=55 // pred_check
                _
              $region69: #{tpu_custom_call.1} parent=55 // pred_check_branch
                %313 = sbr.rel (0) target = $region71
              $region70: #{tpu_custom_call.1} parent=55 // pred_region
                loop: start=0, step=1, limit=1
                $region72: #{tpu_custom_call.1} parent=70 // loop_pre_header
                  _
                $region73: #{tpu_custom_call.1} parent=70 // loop_header
                  %s315 = sphi 0, %s319
                  %p316 = scmp.ge.s32.totalorder %s315, 1
                  %s320 = sphi %s291, %s291
                  %s321 = sphi %s289, %s289
                $region74: #{tpu_custom_call.1} parent=70 // loop_header_branch
                  %318 = sbr.rel (%p316) target = $region78
                $region75: #{tpu_custom_call.1} parent=70 // loop_body
                  %v322 = vld [vmem:[%s320] sm:$0xff]
                  %323 = vst [vmem:[%s321] sm:$0xff] %v322
                  %v324 = vld [vmem:[%s320 + $0x10] sm:$0xff]
                  %325 = vst [vmem:[%s321 + $0x8] sm:$0xff] %v324
                $region76: #{tpu_custom_call.1} parent=70 // loop_footer
                  %s319 = sadd.s32 1, %s315
                $region77: #{tpu_custom_call.1} parent=70 // loop_footer_branch
                  %314 = sbr.rel target = $region73
                $region78: #{tpu_custom_call.1} parent=70 // loop_exit
                  _
              $region71: #{tpu_custom_call.1} parent=55 // pred_fallthru
                _
              // Predicated region
              $region79: #{tpu_custom_call.1} parent=55 // pred_check
                _
              $region80: #{tpu_custom_call.1} parent=55 // pred_check_branch
                %327 = sbr.rel target = $region82
              $region81: #{tpu_custom_call.1} parent=55 // pred_region
                _
              $region82: #{tpu_custom_call.1} parent=55 // pred_fallthru
                _
            $region56: #{tpu_custom_call.1} parent=51 // pred_fallthru
              _
            // Predicated region
            $region57: #{tpu_custom_call.1} parent=51 // pred_check
              _
            $region58: #{tpu_custom_call.1} parent=51 // pred_check_branch
              %297 = sbr.rel target = $region60
            $region59: #{tpu_custom_call.1} parent=51 // pred_region
              %s299 = ssub.s32 256, 1
              loop: start=0, step=1, limit=1
              $region61: #{tpu_custom_call.1} parent=59 // loop_pre_header
                _
              $region62: #{tpu_custom_call.1} parent=59 // loop_header
                %s301 = sphi 0, %s305
                %p302 = scmp.ge.s32.totalorder %s301, 1
                %s306 = sphi %s291, %s291
                %s307 = sphi %s289, %s289
              $region63: #{tpu_custom_call.1} parent=59 // loop_header_branch
                %304 = sbr.rel (%p302) target = $region67
              $region64: #{tpu_custom_call.1} parent=59 // loop_body
                %v308 = vld [vmem:[%s306] sm:%s299]
                %309 = vst [vmem:[%s307] sm:%s299] %v308
                %v310 = vld [vmem:[%s306 + $0x10] sm:%s299]
                %311 = vst [vmem:[%s307 + $0x8] sm:%s299] %v310
              $region65: #{tpu_custom_call.1} parent=59 // loop_footer
                %s305 = sadd.s32 1, %s301
              $region66: #{tpu_custom_call.1} parent=59 // loop_footer_branch
                %300 = sbr.rel target = $region62
              $region67: #{tpu_custom_call.1} parent=59 // loop_exit
                _
            $region60: #{tpu_custom_call.1} parent=51 // pred_fallthru
              _
          $region52: #{tpu_custom_call.1} parent=47 // pred_fallthru
            _
          %328 = vnop
        $region48: #{tpu_custom_call.1} parent=43 // pred_fallthru
          _
        // Predicated region
        $region83: #{tpu_custom_call.1} parent=43 // pred_check
          %p329 = pneg %p64
        $region84: #{tpu_custom_call.1} parent=43 // pred_check_branch
          %331 = sbr.rel (%p329) target = $region86
        $region85: #{tpu_custom_call.1} parent=43 // pred_region
          %p332 = scmp.lt.s32.totalorder %s18, 1
          %s333 = scalar_select %p332, %s18, 1
          %s334 = smul.addr %s333, 8
          %s335 = scalar_lea.vmem %s1, %s334
        $region86: #{tpu_custom_call.1} parent=43 // pred_fallthru
          _
      $region44: #{tpu_custom_call.1} parent=5 // pred_fallthru
        _
      %p336 = scmp.le.s32.totalorder 1, %s18
      %p337 = scmp.lt.s32.totalorder %s18, 3
      %p338 = pnand %p336, %p337
      %p339 = pneg %p338
      // Predicated region
      $region87: #{tpu_custom_call.1} parent=5 // pred_check
        _
      $region88: #{tpu_custom_call.1} parent=5 // pred_check_branch
        %341 = sbr.rel (%p338) target = $region90
      $region89: #{tpu_custom_call.1} parent=5 // pred_region
        %s342 = ssub.s32 %s18, 1
        %s343 = sand.u32 %s31, 1
        %s344 = sand.u32 %s31, 1
        %s345 = smul.addr %s344, 16
        %s346 = scalar_lea.vmem [#allocation2], %s345
        // Predicated region
        $region91: #{tpu_custom_call.1} parent=89 // pred_check
          %p347 = pneg %p44
        $region92: #{tpu_custom_call.1} parent=89 // pred_check_branch
          %349 = sbr.rel (%p347) target = $region94
        $region93: #{tpu_custom_call.1} parent=89 // pred_region
          _
        $region94: #{tpu_custom_call.1} parent=89 // pred_fallthru
          _
        %s350 = sand.u32 %s31, 1
        %s351 = sand.u32 %s31, 1
        %s352 = smul.addr %s351, 16
        %s353 = scalar_lea.vmem [#allocation2], %s352
        %p354 = pneg %p44
        %p355 = pneg %p41
        %p356 = scmp.lt.s32.totalorder %s23, 1
        %s357 = scalar_select %p356, %s23, 1
        %s358 = smul.addr %s357, 8
        %s359 = scalar_lea.vmem %s1, %s358
        %p360 = pneg %p70
        %p361 = pneg %p67
        %p362 = pneg %p91
        %p363 = pneg %p88
        %p364 = pneg %p112
        %p365 = pneg %p109
        %p366 = pneg %p133
        %p367 = pneg %p130
        %p368 = pneg %p154
        %p369 = pneg %p151
        %p370 = pneg %p175
        %p371 = pneg %p172
        %p372 = pneg %p196
        %p373 = pneg %p193
        %p374 = pneg %p217
        %p375 = pneg %p214
        %p376 = pneg %p243
        %p377 = pneg %p240
        %s378 = sand.u32 %s230, 1
        %s379 = scalar_lea.sflag [#allocation4], %s378
        %s380 = sand.u32 %s230, 1
        %s381 = smul.addr %s380, 16
        %s382 = scalar_lea.vmem [#allocation3], %s381
        %p383 = scmp.lt.s32.totalorder %s23, 1
        %s384 = scalar_select %p383, %s23, 1
        %s385 = smul.addr %s384, 8
        %s386 = scalar_lea.vmem %s1, %s385
        %v387 = vld [vmem:[%s346] sm:$0xff]
        %v388 = vld [vmem:[%s346 + $0x8] sm:$0xff]
        %v389 = vld [vmem:[%s2] sm:$0xff]
        %v390 = vld [vmem:[%s2 + $0x8] sm:$0xff]
        %v391 = vld [vmem:[%s2 + $0x10] sm:$0xff]
        %v392 = vld [vmem:[%s2 + $0x18] sm:$0xff]
        %v393 = vld [vmem:[%s3] sm:$0xff]
        %v394 = vld [vmem:[%s3 + $0x8] sm:$0xff]
        %v395 = vld [vmem:[%s3 + $0x10] sm:$0xff]
        %v396 = vld [vmem:[%s3 + $0x18] sm:$0xff]
        %398 = vset.pattern.permute.xlu0 0
        %399 = vperm.xlu0 %398, %v393
        %v400 = vpop.permute.xlu0 %399
        %403 = vset.pattern.permute.xlu0 0
        %404 = vperm.xlu0 %403, %v394
        %v405 = vpop.permute.xlu0 %404
        %408 = vset.pattern.permute.xlu0 0
        %409 = vperm.xlu0 %408, %v395
        %v410 = vpop.permute.xlu0 %409
        %413 = vset.pattern.permute.xlu0 0
        %414 = vperm.xlu0 %413, %v396
        %v415 = vpop.permute.xlu0 %414
        %vm417 = vcmask 130048
        %v419 = vsel %vm417, %v389, 0
        %v422 = vsel %vm417, %v390, 0
        %v425 = vsel %vm417, %v391, 0
        %v428 = vsel %vm417, %v392, 0
        %430 = vmatprep.subr.mxu0 0.0
        %431 = vmatpush1.msra.mxu0 0.0
        %432 = vmatprep.subr.mxu0 0.0
        %433 = vmatpush1.msra.mxu0 0.0
        %434 = vmatprep.subr.mxu0 0.0
        %435 = vmatpush1.msra.mxu0 0.0
        %436 = vmatprep.subr.mxu0 0.0
        %437 = vmatpush1.msra.mxu0 0.0
        %438 = vmatprep.subr.mxu0 0.0
        %439 = vmatpush1.msra.mxu0 0.0
        %440 = vmatprep.subr.mxu0 0.0
        %441 = vmatpush1.msra.mxu0 0.0
        %442 = vmatprep.subr.mxu0 0.0
        %443 = vmatpush1.msra.mxu0 0.0
        %444 = vmatprep.subr.mxu0 0.0
        %445 = vmatpush1.msra.mxu0 0.0
        %446 = vmatprep.subr.mxu0 0.0
        %447 = vmatpush1.msra.mxu0 0.0
        %448 = vmatprep.subr.mxu0 0.0
        %449 = vmatpush1.msra.mxu0 0.0
        %450 = vmatprep.subr.mxu0 0.0
        %451 = vmatpush1.msra.mxu0 0.0
        %452 = vmatprep.subr.mxu0 0.0
        %453 = vmatpush1.msra.mxu0 0.0
        %454 = vmatprep.subr.mxu0 0.0
        %455 = vmatpush1.msra.mxu0 0.0
        %456 = vmatprep.subr.mxu0 0.0
        %457 = vmatpush1.msra.mxu0 0.0
        %458 = vmatprep.subr.mxu0 0.0
        %459 = vmatpush1.msra.mxu0 %v388
        %460 = vmatprep.subr.mxu0 0.0
        %461 = vmatpush1.msra.mxu0 %v387
        %462 = vmatprep.subr.mxu0 0.0
        %463 = vmatpush2.msra.mxu0 0.0
        %464 = vmatprep.subr.mxu0 0.0
        %465 = vmatpush2.msra.mxu0 0.0
        %466 = vmatprep.subr.mxu0 0.0
        %467 = vmatpush2.msra.mxu0 0.0
        %468 = vmatprep.subr.mxu0 0.0
        %469 = vmatpush2.msra.mxu0 0.0
        %470 = vmatprep.subr.mxu0 0.0
        %471 = vmatpush2.msra.mxu0 0.0
        %472 = vmatprep.subr.mxu0 0.0
        %473 = vmatpush2.msra.mxu0 0.0
        %474 = vmatprep.subr.mxu0 0.0
        %475 = vmatpush2.msra.mxu0 0.0
        %476 = vmatprep.subr.mxu0 0.0
        %477 = vmatpush2.msra.mxu0 0.0
        %478 = vmatprep.subr.mxu0 0.0
        %479 = vmatpush2.msra.mxu0 0.0
        %480 = vmatprep.subr.mxu0 0.0
        %481 = vmatpush2.msra.mxu0 0.0
        %482 = vmatprep.subr.mxu0 0.0
        %483 = vmatpush2.msra.mxu0 0.0
        %484 = vmatprep.subr.mxu0 0.0
        %485 = vmatpush2.msra.mxu0 0.0
        %486 = vmatprep.subr.mxu0 0.0
        %487 = vmatpush2.msra.mxu0 0.0
        %488 = vmatprep.subr.mxu0 0.0
        %489 = vmatpush2.msra.mxu0 0.0
        %490 = vmatprep.subr.mxu0 0.0
        %491 = vmatpush2.msra.mxu0 0.0
        %492 = vmatprep.subr.mxu0 0.0
        %493 = vmatpush2.msra.mxu0 0.0
        %494 = vmatprep.mubr.f32.mxu0 0.0
        %495 = vmatmul.mubr.f32.gmra.mxu0 %v419
        %v496 = vpop.f32.mrf.mxu0
        %v497 = vadd.f32 %v400, %v496
        %v498 = vpop.f32.mrf.mxu0
        %499 = vmatprep.mubr.f32.mxu0 0.0
        %500 = vmatmul.mubr.f32.gmra.mxu0 %v422
        %v501 = vpop.f32.mrf.mxu0
        %v502 = vadd.f32 %v405, %v501
        %v503 = vpop.f32.mrf.mxu0
        %504 = vmatprep.mubr.f32.mxu0 0.0
        %505 = vmatmul.mubr.f32.gmra.mxu0 %v425
        %v506 = vpop.f32.mrf.mxu0
        %v507 = vadd.f32 %v410, %v506
        %v508 = vpop.f32.mrf.mxu0
        %509 = vmatprep.mubr.f32.mxu0 0.0
        %510 = vmatmul.mubr.f32.gmra.mxu0 %v428
        %v511 = vpop.f32.mrf.mxu0
        %v512 = vadd.f32 %v415, %v511
        %v513 = vpop.f32.mrf.mxu0
        %514 = vdwg.mxu0
        %v515 = vmax.f32 %v497, 0.0
        %v516 = vmax.f32 %v502, 0.0
        %v517 = vmax.f32 %v507, 0.0
        %v518 = vmax.f32 %v512, 0.0
        %v519 = vld [vmem:[%s4] sm:$0xff]
        %v520 = vld [vmem:[%s4 + $0x8] sm:$0xff]
        %v521 = vld [vmem:[%s4 + $0x10] sm:$0xff]
        %v522 = vld [vmem:[%s4 + $0x18] sm:$0xff]
        %v523 = vld [vmem:[%s5] sm:$0xff]
        %v524 = vld [vmem:[%s5 + $0x8] sm:$0xff]
        %v525 = vld [vmem:[%s5 + $0x10] sm:$0xff]
        %v526 = vld [vmem:[%s5 + $0x18] sm:$0xff]
        %528 = vset.pattern.permute.xlu0 0
        %529 = vperm.xlu0 %528, %v523
        %v530 = vpop.permute.xlu0 %529
        %533 = vset.pattern.permute.xlu0 0
        %534 = vperm.xlu0 %533, %v524
        %v535 = vpop.permute.xlu0 %534
        %538 = vset.pattern.permute.xlu0 0
        %539 = vperm.xlu0 %538, %v525
        %v540 = vpop.permute.xlu0 %539
        %543 = vset.pattern.permute.xlu0 0
        %544 = vperm.xlu0 %543, %v526
        %v545 = vpop.permute.xlu0 %544
        %vm547 = vcmask 261120
        %v549 = vsel %vm547, %v519, 0
        %v552 = vsel %vm547, %v520, 0
        %v555 = vsel %vm547, %v521, 0
        %v558 = vsel %vm547, %v522, 0
        %560 = vmatprep.subr.mxu0 0.0
        %561 = vmatpush1.msra.mxu0 0.0
        %562 = vmatprep.subr.mxu0 0.0
        %563 = vmatpush1.msra.mxu0 0.0
        %564 = vmatprep.subr.mxu0 0.0
        %565 = vmatpush1.msra.mxu0 0.0
        %566 = vmatprep.subr.mxu0 0.0
        %567 = vmatpush1.msra.mxu0 0.0
        %568 = vmatprep.subr.mxu0 0.0
        %569 = vmatpush1.msra.mxu0 0.0
        %570 = vmatprep.subr.mxu0 0.0
        %571 = vmatpush1.msra.mxu0 0.0
        %572 = vmatprep.subr.mxu0 0.0
        %573 = vmatpush1.msra.mxu0 0.0
        %574 = vmatprep.subr.mxu0 0.0
        %575 = vmatpush1.msra.mxu0 0.0
        %576 = vmatprep.subr.mxu0 0.0
        %577 = vmatpush1.msra.mxu0 0.0
        %578 = vmatprep.subr.mxu0 0.0
        %579 = vmatpush1.msra.mxu0 0.0
        %580 = vmatprep.subr.mxu0 0.0
        %581 = vmatpush1.msra.mxu0 0.0
        %582 = vmatprep.subr.mxu0 0.0
        %583 = vmatpush1.msra.mxu0 0.0
        %584 = vmatprep.subr.mxu0 0.0
        %585 = vmatpush1.msra.mxu0 %v518
        %586 = vmatprep.subr.mxu0 0.0
        %587 = vmatpush1.msra.mxu0 %v517
        %588 = vmatprep.subr.mxu0 0.0
        %589 = vmatpush1.msra.mxu0 %v516
        %590 = vmatprep.subr.mxu0 0.0
        %591 = vmatpush1.msra.mxu0 %v515
        %592 = vmatprep.subr.mxu0 0.0
        %593 = vmatpush2.msra.mxu0 0.0
        %594 = vmatprep.subr.mxu0 0.0
        %595 = vmatpush2.msra.mxu0 0.0
        %596 = vmatprep.subr.mxu0 0.0
        %597 = vmatpush2.msra.mxu0 0.0
        %598 = vmatprep.subr.mxu0 0.0
        %599 = vmatpush2.msra.mxu0 0.0
        %600 = vmatprep.subr.mxu0 0.0
        %601 = vmatpush2.msra.mxu0 0.0
        %602 = vmatprep.subr.mxu0 0.0
        %603 = vmatpush2.msra.mxu0 0.0
        %604 = vmatprep.subr.mxu0 0.0
        %605 = vmatpush2.msra.mxu0 0.0
        %606 = vmatprep.subr.mxu0 0.0
        %607 = vmatpush2.msra.mxu0 0.0
        %608 = vmatprep.subr.mxu0 0.0
        %609 = vmatpush2.msra.mxu0 0.0
        %610 = vmatprep.subr.mxu0 0.0
        %611 = vmatpush2.msra.mxu0 0.0
        %612 = vmatprep.subr.mxu0 0.0
        %613 = vmatpush2.msra.mxu0 0.0
        %614 = vmatprep.subr.mxu0 0.0
        %615 = vmatpush2.msra.mxu0 0.0
        %616 = vmatprep.subr.mxu0 0.0
        %617 = vmatpush2.msra.mxu0 0.0
        %618 = vmatprep.subr.mxu0 0.0
        %619 = vmatpush2.msra.mxu0 0.0
        %620 = vmatprep.subr.mxu0 0.0
        %621 = vmatpush2.msra.mxu0 0.0
        %622 = vmatprep.subr.mxu0 0.0
        %623 = vmatpush2.msra.mxu0 0.0
        %624 = vmatprep.mubr.f32.mxu0 0.0
        %625 = vmatmul.mubr.f32.gmra.mxu0 %v549
        %v626 = vpop.f32.mrf.mxu0
        %v627 = vadd.f32 %v530, %v626
        %v628 = vpop.f32.mrf.mxu0
        %629 = vmatprep.mubr.f32.mxu0 0.0
        %630 = vmatmul.mubr.f32.gmra.mxu0 %v552
        %v631 = vpop.f32.mrf.mxu0
        %v632 = vadd.f32 %v535, %v631
        %v633 = vpop.f32.mrf.mxu0
        %634 = vmatprep.mubr.f32.mxu0 0.0
        %635 = vmatmul.mubr.f32.gmra.mxu0 %v555
        %v636 = vpop.f32.mrf.mxu0
        %v637 = vadd.f32 %v540, %v636
        %v638 = vpop.f32.mrf.mxu0
        %639 = vmatprep.mubr.f32.mxu0 0.0
        %640 = vmatmul.mubr.f32.gmra.mxu0 %v558
        %v641 = vpop.f32.mrf.mxu0
        %v642 = vadd.f32 %v545, %v641
        %v643 = vpop.f32.mrf.mxu0
        %644 = vdwg.mxu0
        %v645 = vmax.f32 %v627, 0.0
        %v646 = vmax.f32 %v632, 0.0
        %v647 = vmax.f32 %v637, 0.0
        %v648 = vmax.f32 %v642, 0.0
        %v649 = vld [vmem:[%s6] sm:$0xff]
        %v650 = vld [vmem:[%s7] sm:$0xff]
        %652 = vset.pattern.permute.xlu0 0
        %653 = vperm.xlu0 %652, %v650
        %v654 = vpop.permute.xlu0 %653
        %v657 = vsel %vm547, %v649, 0
        %659 = vmatprep.subr.mxu0 0.0
        %660 = vmatpush1.msra.mxu0 0.0
        %661 = vmatprep.subr.mxu0 0.0
        %662 = vmatpush1.msra.mxu0 0.0
        %663 = vmatprep.subr.mxu0 0.0
        %664 = vmatpush1.msra.mxu0 0.0
        %665 = vmatprep.subr.mxu0 0.0
        %666 = vmatpush1.msra.mxu0 0.0
        %667 = vmatprep.subr.mxu0 0.0
        %668 = vmatpush1.msra.mxu0 0.0
        %669 = vmatprep.subr.mxu0 0.0
        %670 = vmatpush1.msra.mxu0 0.0
        %671 = vmatprep.subr.mxu0 0.0
        %672 = vmatpush1.msra.mxu0 0.0
        %673 = vmatprep.subr.mxu0 0.0
        %674 = vmatpush1.msra.mxu0 0.0
        %675 = vmatprep.subr.mxu0 0.0
        %676 = vmatpush1.msra.mxu0 0.0
        %677 = vmatprep.subr.mxu0 0.0
        %678 = vmatpush1.msra.mxu0 0.0
        %679 = vmatprep.subr.mxu0 0.0
        %680 = vmatpush1.msra.mxu0 0.0
        %681 = vmatprep.subr.mxu0 0.0
        %682 = vmatpush1.msra.mxu0 0.0
        %683 = vmatprep.subr.mxu0 0.0
        %684 = vmatpush1.msra.mxu0 %v648
        %685 = vmatprep.subr.mxu0 0.0
        %686 = vmatpush1.msra.mxu0 %v647
        %687 = vmatprep.subr.mxu0 0.0
        %688 = vmatpush1.msra.mxu0 %v646
        %689 = vmatprep.subr.mxu0 0.0
        %690 = vmatpush1.msra.mxu0 %v645
        %691 = vmatprep.subr.mxu0 0.0
        %692 = vmatpush2.msra.mxu0 0.0
        %693 = vmatprep.subr.mxu0 0.0
        %694 = vmatpush2.msra.mxu0 0.0
        %695 = vmatprep.subr.mxu0 0.0
        %696 = vmatpush2.msra.mxu0 0.0
        %697 = vmatprep.subr.mxu0 0.0
        %698 = vmatpush2.msra.mxu0 0.0
        %699 = vmatprep.subr.mxu0 0.0
        %700 = vmatpush2.msra.mxu0 0.0
        %701 = vmatprep.subr.mxu0 0.0
        %702 = vmatpush2.msra.mxu0 0.0
        %703 = vmatprep.subr.mxu0 0.0
        %704 = vmatpush2.msra.mxu0 0.0
        %705 = vmatprep.subr.mxu0 0.0
        %706 = vmatpush2.msra.mxu0 0.0
        %707 = vmatprep.subr.mxu0 0.0
        %708 = vmatpush2.msra.mxu0 0.0
        %709 = vmatprep.subr.mxu0 0.0
        %710 = vmatpush2.msra.mxu0 0.0
        %711 = vmatprep.subr.mxu0 0.0
        %712 = vmatpush2.msra.mxu0 0.0
        %713 = vmatprep.subr.mxu0 0.0
        %714 = vmatpush2.msra.mxu0 0.0
        %715 = vmatprep.subr.mxu0 0.0
        %716 = vmatpush2.msra.mxu0 0.0
        %717 = vmatprep.subr.mxu0 0.0
        %718 = vmatpush2.msra.mxu0 0.0
        %719 = vmatprep.subr.mxu0 0.0
        %720 = vmatpush2.msra.mxu0 0.0
        %721 = vmatprep.subr.mxu0 0.0
        %722 = vmatpush2.msra.mxu0 0.0
        %723 = vmatprep.mubr.f32.mxu0 0.0
        %724 = vmatmul.mubr.f32.gmra.mxu0 %v657
        %v725 = vpop.f32.mrf.mxu0
        %v726 = vadd.f32 %v654, %v725
        %v727 = vpop.f32.mrf.mxu0
        %728 = vdwg.mxu0
        %v729 = vtanh.pop %v726
        %v730 = vld [vmem:[%s8] sm:$0xff]
        %v731 = vmax.f32 %v730, -13.815511
        %v732 = vmul.f32 %v731, 1.442695
        %v733 = vpow.pop %v732
        %v734 = vld [vmem:[%s386] sm:$0xff]
        %736 = vset.pattern.permute.xlu0 0
        %737 = vperm.xlu0 %736, %v733
        %v738 = vpop.permute.xlu0 %737
        %v740 = vmul.f32 %v738, %v734
        %v741 = vadd.f32 %v729, %v740
        %v742 = vmul.f32 %v734, -0.5
        %v743 = vmul.f32 %v742, %v734
        %745 = vset.pattern.permute.xlu0 0
        %746 = vperm.xlu0 %745, %v731
        %v747 = vpop.permute.xlu0 %746
        %v749 = vsub.f32 %v743, %v747
        %v750 = vsub.f32 %v749, 0.9189385
        %751 = vst [vmem:[%s382] sm:$0xff] %v741
        %752 = vst [vmem:[%s382 + $0x8] sm:$0xff] %v750
        %s753 = sand.u32 %s230, 1
        %s754 = scalar_lea.sflag [#allocation4], %s753
        %s755 = sand.u32 %s230, 1
        %s756 = smul.addr %s755, 16
        %s757 = scalar_lea.vmem [#allocation3], %s756
        // Predicated region
        $region95: #{tpu_custom_call.1} parent=89 // pred_check
          %p758 = pneg %p240
        $region96: #{tpu_custom_call.1} parent=89 // pred_check_branch
          %760 = sbr.rel (%p758) target = $region98
        $region97: #{tpu_custom_call.1} parent=89 // pred_region
          %s762 = ssub.s32 256, 256
          %763 = vsyncadd %s754, %s762
          %s764 = smul.addr %s23, 128
          %s765 = scalar_lea.hbm %s9, %s764
          %s766 = sshll.u32 %s757, 4
          %s767 = int_to_ptr.vmem [resolvable:$true] %s766
          %772 = dma.vmem_to_hbm [thread:$0]  %s767, 256, %s765, %s754, 128, 256, 8
        $region98: #{tpu_custom_call.1} parent=89 // pred_fallthru
          _
      $region90: #{tpu_custom_call.1} parent=5 // pred_fallthru
        _
      %p773 = scmp.le.s32.totalorder 2, %s18
      // Predicated region
      $region99: #{tpu_custom_call.1} parent=5 // pred_check
        %p774 = pneg %p773
      $region100: #{tpu_custom_call.1} parent=5 // pred_check_branch
        %776 = sbr.rel (%p774) target = $region102
      $region101: #{tpu_custom_call.1} parent=5 // pred_region
        %s777 = ssub.s32 %s18, 2
        // Predicated region
        $region103: #{tpu_custom_call.1} parent=101 // pred_check
          %p778 = pneg %p246
        $region104: #{tpu_custom_call.1} parent=101 // pred_check_branch
          %780 = sbr.rel (%p778) target = $region106
        $region105: #{tpu_custom_call.1} parent=101 // pred_region
          %s781 = sand.u32 %s231, 1
          %s782 = scalar_lea.sflag [#allocation4], %s781
          %s783 = sand.u32 %s231, 1
          %s784 = smul.addr %s783, 16
          %s785 = scalar_lea.vmem [#allocation3], %s784
          %786 = dma.done %s782, 256
        $region106: #{tpu_custom_call.1} parent=101 // pred_fallthru
          _
      $region102: #{tpu_custom_call.1} parent=5 // pred_fallthru
        _
    $region6: #{tpu_custom_call.1} parent=1 // loop_footer
      %s22 = sadd.s32 1, %s18
    $region7: #{tpu_custom_call.1} parent=1 // loop_footer_branch
      %17 = sbr.rel target = $region3
    $region8: #{tpu_custom_call.1} parent=1 // loop_exit
      _
    %787 = vsyncpa [#allocation4], 1
    %s788 = scalar_lea.sflag [#allocation4], 1
    %789 = vsyncpa %s788, 1

</llo_original>
